<compile_context>
chip_gen: v7x
topology: tpu7x:2x2x1
jax: 0.10.0
libtpu: 0.0.40
codegen_flags: <defaults>
</compile_context>

<pallas_src>
import math
import functools

import jax
import jax.numpy as jnp
from jax.experimental import pallas as pl
from jax.experimental.pallas import tpu as pltpu


def _round_up(x: int, m: int) -> int:
    return (x + m - 1) // m * m


def _fconvex_kernel(x_ref, w_ref, b_ref, out_ref):
    # x_ref: (TILE_N, K_pad)   w_ref: (K_pad, OUT_pad)   b_ref: (1, OUT_pad)
    acc = jnp.dot(x_ref[...], w_ref[...], preferred_element_type=jnp.float32)
    out_ref[...] = (acc + b_ref[...]).astype(out_ref.dtype)


def linear_fconvex(y, z, weight_y, weight_z, bias, *, tile_n=256):
    """y:(N,Yin)  z:(N,Zin) or None  ->  (N,Out).

    Computes  z @ weight_z.T + y @ weight_y.T + bias  with a single fused,
    batch-tiled Pallas matmul.
    """
    n, yin = y.shape
    out_dim = weight_y.shape[0]

    # ---- fuse the two linears: x = [y|z], W = [weight_y|weight_z] -----------
    if z is not None and weight_z is not None:
        x = jnp.concatenate([y, z], axis=1)                   # (N, Yin+Zin)
        w = jnp.concatenate([weight_y, weight_z], axis=1)     # (Out, Yin+Zin)
    else:
        x, w = y, weight_y
    k = x.shape[1]

    # ---- host-side packing: pre-transpose + zero-pad to lane-dense shapes ---
    k_pad = _round_up(k, 128)
    out_pad = _round_up(out_dim, 128)

    w_t = jnp.zeros((k_pad, out_pad), x.dtype)
    w_t = w_t.at[:k, :out_dim].set(w.T.astype(x.dtype))       # MXU-native RHS

    b_row = jnp.zeros((1, out_pad), jnp.float32)
    if bias is not None:
        b_row = b_row.at[0, :out_dim].set(bias.astype(jnp.float32))

    # ---- batch tiling (sized conservatively for v7x's 64 MiB VMEM) ----------
    tile_n = min(tile_n, _round_up(n, 8))
    n_pad = _round_up(n, tile_n)
    x_p = jnp.zeros((n_pad, k_pad), x.dtype).at[:n, :k].set(x)

    grid = (n_pad // tile_n,)

    bytes_accessed = (
        x_p.size * x_p.dtype.itemsize
        + w_t.size * w_t.dtype.itemsize
        + b_row.size * 4
        + n_pad * out_pad * 4
    )

    out = pl.pallas_call(
        _fconvex_kernel,
        out_shape=jax.ShapeDtypeStruct((n_pad, out_pad), jnp.float32),
        grid_spec=pltpu.PrefetchScalarGridSpec(
            num_scalar_prefetch=0,
            grid=grid,
            in_specs=[
                pl.BlockSpec((tile_n, k_pad), lambda i: (i, 0)),   # pipelined
                pl.BlockSpec((k_pad, out_pad), lambda i: (0, 0)),  # resident
                pl.BlockSpec((1, out_pad), lambda i: (0, 0)),      # resident
            ],
            out_specs=pl.BlockSpec((tile_n, out_pad), lambda i: (i, 0)),
        ),
        compiler_params=pltpu.CompilerParams(
            dimension_semantics=("parallel",),
        ),
        cost_estimate=pl.CostEstimate(
            flops=2 * n_pad * k_pad * out_pad,
            transcendentals=0,
            bytes_accessed=bytes_accessed,
        ),
    )(x_p, w_t, b_row)

    return out[:n, :out_dim]


# --------------------------------------------------------------------------- #
# Parameter init mimicking the PyTorch module's reset_parameters()
# --------------------------------------------------------------------------- #
def init_params(key, input_features, prev_features, out_features, bias=True):
    keys = jax.random.split(key, 3)
    eps = 1e-18

    def kaiming_uniform(k, shape):
        # kaiming_uniform_(a=sqrt(5)) => bound = 1/sqrt(fan_in), fan_in = shape[1]
        bound = 1.0 / math.sqrt(shape[1])
        return jax.random.uniform(k, shape, jnp.float32, -bound, bound)

    weight_y = kaiming_uniform(keys[0], (out_features, input_features))
    weight_z = None
    if prev_features is not None:
        weight_z = jnp.clip(
            kaiming_uniform(keys[1], (out_features, prev_features)), eps, None
        )
    b = None
    if bias:
        bound = 1.0 / math.sqrt(input_features)   # fan_in of weight_y
        b = jax.random.uniform(keys[2], (out_features,), jnp.float32, -bound, bound)

    return dict(weight_y=weight_y, weight_z=weight_z, bias=b)


def reference_forward(y, z, p):
    hi = jax.lax.Precision.HIGHEST
    wy = jnp.dot(y, p["weight_y"].T, precision=hi) + p["bias"]
    if z is None or p["weight_z"] is None:
        return wy
    wz = jnp.dot(z, p["weight_z"].T, precision=hi)
    return wz + wy


if __name__ == "__main__":
    N, YIN, ZIN, OUT = 16, 24, 12, 40

    key = jax.random.PRNGKey(0)
    k_y, k_z, k_p, k_p0 = jax.random.split(key, 4)

    y = jax.random.uniform(k_y, (N, YIN), jnp.float32)
    z = jax.random.uniform(k_z, (N, ZIN), jnp.float32)

    # --- standard layer: out = z @ Wz.T + y @ Wy.T + b -----------------------
    params = init_params(k_p, YIN, ZIN, OUT)
    out = linear_fconvex(y, z, params["weight_y"], params["weight_z"],
                         params["bias"])
    out = jax.block_until_ready(out)
    ref = reference_forward(y, z, params)
    assert out.shape == (N, OUT)
    assert jnp.allclose(out, ref, atol=1e-4, rtol=1e-4), "mismatch (two-input)"

    # --- "first layer" mode: prev_features is None, out = y @ Wy.T + b -------
    params0 = init_params(k_p0, YIN, None, OUT)
    out0 = linear_fconvex(y, None, params0["weight_y"], None, params0["bias"])
    out0 = jax.block_until_ready(out0)
    ref0 = reference_forward(y, None, params0)
    assert out0.shape == (N, OUT)
    assert jnp.allclose(out0, ref0, atol=1e-4, rtol=1e-4), "mismatch (first layer)"

    print("KERNEL_OK")
</pallas_src>

<mosaic_0001>
module attributes {stable_mosaic.version = 11 : i64} {
  func.func @_fconvex_kernel(%arg0: i32, %arg1: memref<16x128xf32, #tpu.memory_space<vmem>>, %arg2: memref<128x128xf32, #tpu.memory_space<vmem>>, %arg3: memref<1x128xf32, #tpu.memory_space<vmem>>, %arg4: memref<16x128xf32, #tpu.memory_space<vmem>>) attributes {dimension_semantics = [#tpu.dimension_semantics<parallel>], iteration_bounds = array<i64: 1>, scalar_prefetch = 0 : i64, scratch_operands = 0 : i64, tpu.core_type = #tpu.core_type<tc>, window_params = [{transform_indices = @transform_0, window_bounds = array<i64: 16, 128>}, {pipeline_mode = #tpu.pipeline_mode<synchronous>, transform_indices = @transform_1, window_bounds = array<i64: 128, 128>}, {pipeline_mode = #tpu.pipeline_mode<synchronous>, transform_indices = @transform_2, window_bounds = array<i64: 1, 128>}, {transform_indices = @transform_3, window_bounds = array<i64: 16, 128>}]} {
    %c0 = arith.constant 0 : index
    %c0_0 = arith.constant 0 : index
    %0 = vector.load %arg1[%c0, %c0_0] : memref<16x128xf32, #tpu.memory_space<vmem>>, vector<16x128xf32>
    %c0_1 = arith.constant 0 : index
    %c0_2 = arith.constant 0 : index
    %1 = vector.load %arg2[%c0_1, %c0_2] : memref<128x128xf32, #tpu.memory_space<vmem>>, vector<128x128xf32>
    %cst = arith.constant dense<0.000000e+00> : vector<16x128xf32>
    %2 = tpu.matmul %0, %1, %cst {dimension_numbers = #tpu.dot_dimension_numbers<[1], [0], [0], [1], [0, 0, 1, 1], [], []>} : vector<16x128xf32>, vector<128x128xf32>, vector<16x128xf32> -> vector<16x128xf32>
    %c0_3 = arith.constant 0 : index
    %c0_4 = arith.constant 0 : index
    %3 = vector.load %arg3[%c0_3, %c0_4] : memref<1x128xf32, #tpu.memory_space<vmem>>, vector<1x128xf32>
    %4 = vector.broadcast %3 : vector<1x128xf32> to vector<16x128xf32>
    %5 = arith.addf %2, %4 : vector<16x128xf32>
    %c0_5 = arith.constant 0 : index
    %c0_6 = arith.constant 0 : index
    %6 = vector.load %arg4[%c0_5, %c0_6] : memref<16x128xf32, #tpu.memory_space<vmem>>, vector<16x128xf32>
    tpu.vector_store %arg4[%c0_5, %c0_6], %5 {strides = array<i32>} : memref<16x128xf32, #tpu.memory_space<vmem>>, vector<16x128xf32>,
    return
  }
  func.func @transform_0(%arg0: i32) -> (i32, i32) {
    %c0_i32 = arith.constant 0 : i32
    %c0_i32_0 = arith.constant 0 : i32
    return %arg0, %c0_i32 : i32, i32
  }
  func.func @transform_1(%arg0: i32) -> (i32, i32) {
    %c0_i32 = arith.constant 0 : i32
    %c0_i32_0 = arith.constant 0 : i32
    %c0_i32_1 = arith.constant 0 : i32
    return %c0_i32, %c0_i32_0 : i32, i32
  }
  func.func @transform_2(%arg0: i32) -> (i32, i32) {
    %c0_i32 = arith.constant 0 : i32
    %c0_i32_0 = arith.constant 0 : i32
    %c0_i32_1 = arith.constant 0 : i32
    return %c0_i32, %c0_i32_0 : i32, i32
  }
  func.func @transform_3(%arg0: i32) -> (i32, i32) {
    %c0_i32 = arith.constant 0 : i32
    %c0_i32_0 = arith.constant 0 : i32
    return %arg0, %c0_i32 : i32, i32
  }
}

</mosaic_0001>

<llo_original>
// kernel: tpu_custom_call.1
$region0: #{tpu_custom_call.1}
  #allocation0 [shape = 'u32[]', space=smem, size = 0x4, offset = 0x4, fixed_abs, tag = 'smem constant byte address 0x4 - core index']
  #allocation1 [shape = 'u32[144,128]{1,0:T(1,128)}', space=vmem, size = 0x12000, scoped, tag = 'internal scratch']
  %s0 = inlined_call_operand.hbm [shape: f32[16,128], index: 0, kind: input, shape index: {}]
  %s1 = inlined_call_operand.hbm [shape: f32[128,128], index: 1, kind: input, shape index: {}]
  %s2 = inlined_call_operand.vmem [shape: f32[1,128], index: 2, kind: input, shape index: {}]
  %s3 = inlined_call_operand.hbm [shape: f32[16,128], index: 3, kind: output, shape index: {}]
  %s4 = sld [smem:[#allocation0]]
  $region30: #{tpu_custom_call.1} parent=0
    _
  %s6 = ssub.s32 1, %s4
  %s7 = scalar_select 0, %s6, %s4
  $region1: #{tpu_custom_call.1} parent=0
    #allocation2 [shape = 'u8[8192]{0}', space=vmem, size = 0x2000, scoped, tag = 'input window, operand 0, single buffered']
    #allocation3 [shape = 's32[1]{0}', space=sflag, size = 0x4, scoped, tag = 'scoped memory for tpu_custom_call.1']
    #allocation4 [shape = 's32[1]{0}', space=sflag, size = 0x4, scoped, tag = 'scoped memory for tpu_custom_call.1']
    #allocation5 [shape = 'u8[65536]{0}', space=vmem, size = 0x10000, scoped, tag = 'input window, operand 1, single buffered']
    #allocation6 [shape = 's32[1]{0}', space=sflag, size = 0x4, scoped, tag = 'scoped memory for tpu_custom_call.1']
    #allocation7 [shape = 'u8[8192]{0}', space=vmem, size = 0x2000, scoped, tag = 'output window, operand 0, single buffered']
    %8 = vsyncpa [#allocation3], 0
    %9 = vsyncpa [#allocation6], 0
    %10 = vsyncpa [#allocation4], 0
    // Predicated region
    $region2: #{tpu_custom_call.1} parent=1 // pred_check
      _
    $region3: #{tpu_custom_call.1} parent=1 // pred_check_branch
      %12 = sbr.rel (0) target = $region5
    $region4: #{tpu_custom_call.1} parent=1 // pred_region
      %s14 = ssub.s32 256, 256
      %15 = vsyncadd [#allocation3], %s14
      %s16 = sshll.u32 [#allocation2], 4
      %s17 = int_to_ptr.vmem [resolvable:$true] %s16
      %22 = dma.hbm_to_vmem [thread:$0]  %s0, 256, %s17, [#allocation3], 128, 128, 8
    $region5: #{tpu_custom_call.1} parent=1 // pred_fallthru
      _
    // Predicated region
    $region6: #{tpu_custom_call.1} parent=1 // pred_check
      _
    $region7: #{tpu_custom_call.1} parent=1 // pred_check_branch
      %24 = sbr.rel (0) target = $region9
    $region8: #{tpu_custom_call.1} parent=1 // pred_region
      %s26 = ssub.s32 2048, 2048
      %27 = vsyncadd [#allocation6], %s26
      %s28 = sshll.u32 [#allocation5], 4
      %s29 = int_to_ptr.vmem [resolvable:$true] %s28
      %34 = dma.hbm_to_vmem [thread:$0]  %s1, 2048, %s29, [#allocation6], 128, 128, 8
    $region9: #{tpu_custom_call.1} parent=1 // pred_fallthru
      _
    // Predicated region
    $region10: #{tpu_custom_call.1} parent=1 // pred_check
      _
    $region11: #{tpu_custom_call.1} parent=1 // pred_check_branch
      %36 = sbr.rel (0) target = $region13
    $region12: #{tpu_custom_call.1} parent=1 // pred_region
      _
    $region13: #{tpu_custom_call.1} parent=1 // pred_fallthru
      _
    // Predicated region
    $region14: #{tpu_custom_call.1} parent=1 // pred_check
      _
    $region15: #{tpu_custom_call.1} parent=1 // pred_check_branch
      %38 = sbr.rel (0) target = $region17
    $region16: #{tpu_custom_call.1} parent=1 // pred_region
      %39 = dma.done [#allocation3], 256
    $region17: #{tpu_custom_call.1} parent=1 // pred_fallthru
      _
    // Predicated region
    $region18: #{tpu_custom_call.1} parent=1 // pred_check
      _
    $region19: #{tpu_custom_call.1} parent=1 // pred_check_branch
      %41 = sbr.rel (0) target = $region21
    $region20: #{tpu_custom_call.1} parent=1 // pred_region
      %42 = dma.done [#allocation6], 2048
    $region21: #{tpu_custom_call.1} parent=1 // pred_fallthru
      _
    %v43 = vld [vmem:[#allocation2] sm:$0xff]
    %v44 = vld [vmem:[#allocation2 + $0x8] sm:$0xff]
    %v45 = vld [vmem:[#allocation5] sm:$0xff]
    %v46 = vld [vmem:[#allocation5 + $0x8] sm:$0xff]
    %v47 = vld [vmem:[#allocation5 + $0x10] sm:$0xff]
    %v48 = vld [vmem:[#allocation5 + $0x18] sm:$0xff]
    %v49 = vld [vmem:[#allocation5 + $0x20] sm:$0xff]
    %v50 = vld [vmem:[#allocation5 + $0x28] sm:$0xff]
    %v51 = vld [vmem:[#allocation5 + $0x30] sm:$0xff]
    %v52 = vld [vmem:[#allocation5 + $0x38] sm:$0xff]
    %v53 = vld [vmem:[#allocation5 + $0x40] sm:$0xff]
    %v54 = vld [vmem:[#allocation5 + $0x48] sm:$0xff]
    %v55 = vld [vmem:[#allocation5 + $0x50] sm:$0xff]
    %v56 = vld [vmem:[#allocation5 + $0x58] sm:$0xff]
    %v57 = vld [vmem:[#allocation5 + $0x60] sm:$0xff]
    %v58 = vld [vmem:[#allocation5 + $0x68] sm:$0xff]
    %v59 = vld [vmem:[#allocation5 + $0x70] sm:$0xff]
    %v60 = vld [vmem:[#allocation5 + $0x78] sm:$0xff]
    %v61 = vld [vmem:[%s2] sm:$0x1]
    %v63 = vlaneseq
    %v64 = vshrl.u32 %v63, 7
    %v65 = vsub.s32 0, %v64
    %v66 = vrot.slane %v61, %v65
    %68 = vmatprep.subr.mxu0 0.0
    %69 = vmatpush1.msra.mxu0 %v45
    %70 = vmatprep.subr.mxu0 0.0
    %71 = vmatpush1.msra.mxu0 %v46
    %72 = vmatprep.subr.mxu0 0.0
    %73 = vmatpush1.msra.mxu0 %v47
    %74 = vmatprep.subr.mxu0 0.0
    %75 = vmatpush1.msra.mxu0 %v48
    %76 = vmatprep.subr.mxu0 0.0
    %77 = vmatpush1.msra.mxu0 %v49
    %78 = vmatprep.subr.mxu0 0.0
    %79 = vmatpush1.msra.mxu0 %v50
    %80 = vmatprep.subr.mxu0 0.0
    %81 = vmatpush1.msra.mxu0 %v51
    %82 = vmatprep.subr.mxu0 0.0
    %83 = vmatpush1.msra.mxu0 %v52
    %84 = vmatprep.subr.mxu0 0.0
    %85 = vmatpush1.msra.mxu0 %v53
    %86 = vmatprep.subr.mxu0 0.0
    %87 = vmatpush1.msra.mxu0 %v54
    %88 = vmatprep.subr.mxu0 0.0
    %89 = vmatpush1.msra.mxu0 %v55
    %90 = vmatprep.subr.mxu0 0.0
    %91 = vmatpush1.msra.mxu0 %v56
    %92 = vmatprep.subr.mxu0 0.0
    %93 = vmatpush1.msra.mxu0 %v57
    %94 = vmatprep.subr.mxu0 0.0
    %95 = vmatpush1.msra.mxu0 %v58
    %96 = vmatprep.subr.mxu0 0.0
    %97 = vmatpush1.msra.mxu0 %v59
    %98 = vmatprep.subr.mxu0 0.0
    %99 = vmatpush1.msra.mxu0 %v60
    %100 = vmatprep.subr.mxu0 0.0
    %101 = vmatpush1.msra.mxu0 0.0
    %102 = vmatprep.subr.mxu0 0.0
    %103 = vmatpush1.msra.mxu0 0.0
    %104 = vmatprep.subr.mxu0 0.0
    %105 = vmatpush1.msra.mxu0 0.0
    %106 = vmatprep.subr.mxu0 0.0
    %107 = vmatpush1.msra.mxu0 0.0
    %108 = vmatprep.subr.mxu0 0.0
    %109 = vmatpush1.msra.mxu0 0.0
    %110 = vmatprep.subr.mxu0 0.0
    %111 = vmatpush1.msra.mxu0 0.0
    %112 = vmatprep.subr.mxu0 0.0
    %113 = vmatpush1.msra.mxu0 0.0
    %114 = vmatprep.subr.mxu0 0.0
    %115 = vmatpush1.msra.mxu0 0.0
    %116 = vmatprep.subr.mxu0 0.0
    %117 = vmatpush1.msra.mxu0 0.0
    %118 = vmatprep.subr.mxu0 0.0
    %119 = vmatpush1.msra.mxu0 0.0
    %120 = vmatprep.subr.mxu0 0.0
    %121 = vmatpush1.msra.mxu0 0.0
    %122 = vmatprep.subr.mxu0 0.0
    %123 = vmatpush1.msra.mxu0 0.0
    %124 = vmatprep.subr.mxu0 0.0
    %125 = vmatpush1.msra.mxu0 0.0
    %126 = vmatprep.subr.mxu0 0.0
    %127 = vmatpush1.msra.mxu0 0.0
    %128 = vmatprep.subr.mxu0 0.0
    %129 = vmatpush1.msra.mxu0 0.0
    %130 = vmatprep.subr.mxu0 0.0
    %131 = vmatpush1.msra.mxu0 0.0
    %132 = vmatprep.mubr.f32.mxu0 0.0
    %133 = vmatmul.mubr.f32.gmra.mrb[0].mxu0 %v43
    %v134 = vpop.f32.mrb[0].mxu0
    %v135 = vadd.f32 %v66, %v134
    %v136 = vpop.f32.mrb[0].mxu0
    %137 = vmatprep.mubr.f32.mxu0 0.0
    %138 = vmatmul.mubr.f32.gmra.mrb[0].mxu0 %v44
    %v139 = vpop.f32.mrb[0].mxu0
    %v140 = vadd.f32 %v66, %v139
    %v141 = vpop.f32.mrb[0].mxu0
    %142 = vdwg.mxu0
    %143 = vst [vmem:[#allocation7] sm:$0xff] %v135
    %144 = vst [vmem:[#allocation7 + $0x8] sm:$0xff] %v140
    // Predicated region
    $region22: #{tpu_custom_call.1} parent=1 // pred_check
      _
    $region23: #{tpu_custom_call.1} parent=1 // pred_check_branch
      %146 = sbr.rel (0) target = $region25
    $region24: #{tpu_custom_call.1} parent=1 // pred_region
      %s148 = ssub.s32 256, 256
      %149 = vsyncadd [#allocation4], %s148
      %s150 = sshll.u32 [#allocation7], 4
      %s151 = int_to_ptr.vmem [resolvable:$true] %s150
      %156 = dma.vmem_to_hbm [thread:$0]  %s151, 256, %s3, [#allocation4], 128, 128, 8
    $region25: #{tpu_custom_call.1} parent=1 // pred_fallthru
      _
    // Predicated region
    $region26: #{tpu_custom_call.1} parent=1 // pred_check
      _
    $region27: #{tpu_custom_call.1} parent=1 // pred_check_branch
      %158 = sbr.rel (0) target = $region29
    $region28: #{tpu_custom_call.1} parent=1 // pred_region
      %159 = dma.done [#allocation4], 256
    $region29: #{tpu_custom_call.1} parent=1 // pred_fallthru
      _
    %160 = vsyncpa [#allocation3], 1
    %161 = vsyncpa [#allocation6], 1
    %162 = vsyncpa [#allocation4], 1

</llo_original>
